<compile_context>
chip_gen: v6e
topology: v6e:2x2x1
jax: 0.10.0
libtpu: 0.0.40
codegen_flags: <defaults>
</compile_context>

<pallas_src>
import functools

import jax
import jax.numpy as jnp
from jax import lax
from jax.experimental import pallas as pl
from jax.experimental.pallas import tpu as pltpu


# ---------------------------------------------------------------------------
# Kernels
# ---------------------------------------------------------------------------
def _visnet_kernel_single(x_ref, w_ref, scale_ref, off_ref, o_ref, *,
                          activation):
    """Single-K-tile variant: matmul + fused (scale, offset, activation)."""
    y = jnp.dot(x_ref[...], w_ref[...], preferred_element_type=jnp.float32)
    y = y * scale_ref[...] + off_ref[...]
    if activation == "tanh":
        y = jnp.tanh(y)
    elif activation == "relu":
        y = jnp.maximum(y, 0.0)
    o_ref[...] = y


def _visnet_kernel_acc(x_ref, w_ref, scale_ref, off_ref, o_ref, *,
                       activation):
    """K-tiled variant: accumulate directly into the resident f32 output block."""
    k = pl.program_id(2)

    @pl.when(k == 0)
    def _():
        o_ref[...] = jnp.zeros_like(o_ref)

    o_ref[...] += jnp.dot(x_ref[...], w_ref[...],
                          preferred_element_type=jnp.float32)

    @pl.when(k == pl.num_programs(2) - 1)
    def _():
        y = o_ref[...] * scale_ref[...] + off_ref[...]
        if activation == "tanh":
            y = jnp.tanh(y)
        elif activation == "relu":
            y = jnp.maximum(y, 0.0)
        o_ref[...] = y


# ---------------------------------------------------------------------------
# Helpers
# ---------------------------------------------------------------------------
def _round_up(x, m):
    return (x + m - 1) // m * m


def _pick_tile(padded, pref, base):
    """Largest multiple of `base` that is <= pref and divides `padded`."""
    t = max(base, min(padded, (pref // base) * base))
    while padded % t:
        t -= base
    return t


# ---------------------------------------------------------------------------
# One-time parameter preparation (pad + fold BN + fold spaces + cast)
# ---------------------------------------------------------------------------
def prepare_params(weight, bias, bn_gamma=None, bn_beta=None, bn_mean=None,
                   bn_var=None, *, use_bn=True, bn_eps=1e-5,
                   compute_dtype=jnp.bfloat16):
    """Fold S independent Linear+BN layers into one packed weight/scale/offset.

    weight : (S, D_in, D_out)   (PyTorch nn.Linear weight, transposed)
    bias   : (S, D_out)
    bn_*   : (S, D_out)         BatchNorm1d params / running stats (if use_bn)
    """
    weight = jnp.asarray(weight, jnp.float32)
    bias = jnp.asarray(bias, jnp.float32)
    S, D_in, D_out = weight.shape

    if use_bn:
        gamma = jnp.asarray(bn_gamma, jnp.float32)
        beta = jnp.asarray(bn_beta, jnp.float32)
        mean = jnp.asarray(bn_mean, jnp.float32)
        var = jnp.asarray(bn_var, jnp.float32)
        scale = gamma * lax.rsqrt(var + bn_eps)            # (S, D_out)
        offset = beta + (bias - mean) * scale              # (S, D_out)
    else:
        scale = jnp.ones_like(bias)
        offset = bias

    Kp = _round_up(D_in, 128)
    Np = _round_up(D_out, 128)

    # (S, D_in, D_out) -> zero-pad -> (Kp, S*Np); space s owns columns
    # [s*Np, s*Np + D_out).  Padded K rows / N columns are zero.
    w_p = jnp.pad(weight, ((0, 0), (0, Kp - D_in), (0, Np - D_out)))
    w_folded = jnp.transpose(w_p, (1, 0, 2)).reshape(Kp, S * Np)
    w_folded = w_folded.astype(compute_dtype)

    scale_p = jnp.pad(scale, ((0, 0), (0, Np - D_out))).reshape(1, S * Np)
    offset_p = jnp.pad(offset, ((0, 0), (0, Np - D_out))).reshape(1, S * Np)

    return {
        "w": w_folded,                    # (Kp, S*Np) compute_dtype
        "scale": scale_p,                 # (1, S*Np)  float32
        "offset": offset_p,               # (1, S*Np)  float32
        "S": S, "D_in": D_in, "D_out": D_out,
        "Kp": Kp, "Np": Np,
        "compute_dtype": compute_dtype,
    }


# ---------------------------------------------------------------------------
# Forward
# ---------------------------------------------------------------------------
def multi_space_visnet(vis_input, params, *, activation="tanh",
                       bm=None, bn_tile=None, bk=None):
    """Pallas implementation of MultiSpaceVisNet.forward (eval mode).

    vis_input : (B, D_in) float32, shared across spaces.
    params    : output of prepare_params().
    returns   : tuple of S arrays, each (B, D_out) float32.
    """
    S, D_in, D_out = params["S"], params["D_in"], params["D_out"]
    Kp, Np = params["Kp"], params["Np"]
    N_total = S * Np
    compute_dtype = params["compute_dtype"]

    x = jnp.asarray(vis_input, jnp.float32)
    B = x.shape[0]
    Bp = _round_up(B, 8)
    if (B, D_in) != (Bp, Kp):
        x = jnp.pad(x, ((0, Bp - B), (0, Kp - D_in)))
    x = x.astype(compute_dtype)

    auto_bn_tile = bn_tile is None
    bm = bm or _pick_tile(Bp, 256, 8)
    bn_tile = bn_tile or _pick_tile(N_total, 512, 128)
    bk = bk or _pick_tile(Kp, 1024, 128)

    # Keep >= 2 parallel blocks so both v7x TensorCores get work.
    if auto_bn_tile and (Bp // bm) * (N_total // bn_tile) < 2 \
            and N_total // 128 >= 2:
        bn_tile = _pick_tile(N_total, max(128, bn_tile // 2), 128)

    kt = Kp // bk

    itemsize = jnp.dtype(compute_dtype).itemsize
    cost = pl.CostEstimate(
        flops=2 * Bp * Kp * N_total,
        transcendentals=Bp * N_total if activation == "tanh" else 0,
        bytes_accessed=(Bp * Kp * itemsize + Kp * N_total * itemsize
                        + 2 * N_total * 4 + Bp * N_total * 4),
    )

    if kt == 1:
        kernel = functools.partial(_visnet_kernel_single, activation=activation)
        grid = (Bp // bm, N_total // bn_tile)
        in_specs = [
            pl.BlockSpec((bm, Kp), lambda i, j: (i, 0)),
            pl.BlockSpec((Kp, bn_tile), lambda i, j: (0, j)),
            pl.BlockSpec((1, bn_tile), lambda i, j: (0, j)),
            pl.BlockSpec((1, bn_tile), lambda i, j: (0, j)),
        ]
        out_specs = pl.BlockSpec((bm, bn_tile), lambda i, j: (i, j))
        semantics = ("parallel", "parallel")
    else:
        kernel = functools.partial(_visnet_kernel_acc, activation=activation)
        grid = (Bp // bm, N_total // bn_tile, kt)
        in_specs = [
            pl.BlockSpec((bm, bk), lambda i, j, k: (i, k)),
            pl.BlockSpec((bk, bn_tile), lambda i, j, k: (k, j)),
            pl.BlockSpec((1, bn_tile), lambda i, j, k: (0, j)),
            pl.BlockSpec((1, bn_tile), lambda i, j, k: (0, j)),
        ]
        out_specs = pl.BlockSpec((bm, bn_tile), lambda i, j, k: (i, j))
        semantics = ("parallel", "parallel", "arbitrary")

    out = pl.pallas_call(
        kernel,
        out_shape=jax.ShapeDtypeStruct((Bp, N_total), jnp.float32),
        grid_spec=pltpu.PrefetchScalarGridSpec(
            num_scalar_prefetch=0,
            grid=grid,
            in_specs=in_specs,
            out_specs=out_specs,
        ),
        compiler_params=pltpu.CompilerParams(dimension_semantics=semantics),
        cost_estimate=cost,
    )(x, params["w"], params["scale"], params["offset"])

    return tuple(out[:B, s * Np: s * Np + D_out] for s in range(S))


# ---------------------------------------------------------------------------
# Pure-JAX reference (PyTorch eval-mode semantics)
# ---------------------------------------------------------------------------
def _reference(vis_input, weight, bias, gamma, beta, mean, var,
               activation="tanh", use_bn=True, bn_eps=1e-5):
    outs = []
    for s in range(weight.shape[0]):
        y = vis_input @ weight[s] + bias[s]
        if use_bn:
            y = (y - mean[s]) / jnp.sqrt(var[s] + bn_eps) * gamma[s] + beta[s]
        if activation == "tanh":
            y = jnp.tanh(y)
        elif activation == "relu":
            y = jnp.maximum(y, 0.0)
        outs.append(y)
    return outs


if __name__ == "__main__":
    key = jax.random.PRNGKey(0)
    S, B, D_in, D_out = 2, 2, 32, 64        # num spaces, batch, vis_fc_layers

    ks = jax.random.split(key, 7)
    x = jax.random.normal(ks[0], (B, D_in), dtype=jnp.float32)
    w = 0.2 * jax.random.normal(ks[1], (S, D_in, D_out), dtype=jnp.float32)
    b = 0.1 * jax.random.normal(ks[2], (S, D_out), dtype=jnp.float32)
    gamma = 1.0 + 0.1 * jax.random.normal(ks[3], (S, D_out), dtype=jnp.float32)
    beta = 0.1 * jax.random.normal(ks[4], (S, D_out), dtype=jnp.float32)
    mean = 0.1 * jax.random.normal(ks[5], (S, D_out), dtype=jnp.float32)
    var = 1.0 + 0.5 * jnp.abs(
        jax.random.normal(ks[6], (S, D_out), dtype=jnp.float32))

    refs = _reference(x, w, b, gamma, beta, mean, var,
                      activation="tanh", use_bn=True)

    # --- bf16 fast path (default) -----------------------------------------
    params_bf16 = prepare_params(w, b, gamma, beta, mean, var, use_bn=True,
                                 compute_dtype=jnp.bfloat16)
    feats = jax.block_until_ready(
        multi_space_visnet(x, params_bf16, activation="tanh"))
    assert len(feats) == S
    for got, ref in zip(feats, refs):
        assert got.shape == (B, D_out)
        assert jnp.allclose(got, ref, atol=5e-2, rtol=5e-2)

    # --- f32 path, tight tolerance -----------------------------------------
    params_f32 = prepare_params(w, b, gamma, beta, mean, var, use_bn=True,
                                compute_dtype=jnp.float32)
    feats32 = jax.block_until_ready(
        multi_space_visnet(x, params_f32, activation="tanh"))
    for got, ref in zip(feats32, refs):
        assert jnp.allclose(got, ref, atol=1e-4, rtol=1e-4)

    # --- exercise the K-tiled accumulator variant ---------------------------
    S2, D_in2, D_out2 = 2, 256, 64
    ks2 = jax.random.split(jax.random.PRNGKey(1), 3)
    x2 = jax.random.normal(ks2[0], (B, D_in2), dtype=jnp.float32)
    w2 = 0.1 * jax.random.normal(ks2[1], (S2, D_in2, D_out2), dtype=jnp.float32)
    b2 = 0.1 * jax.random.normal(ks2[2], (S2, D_out2), dtype=jnp.float32)
    params2 = prepare_params(w2, b2, use_bn=False, compute_dtype=jnp.float32)
    feats2 = jax.block_until_ready(
        multi_space_visnet(x2, params2, activation="relu", bk=128))
    refs2 = _reference(x2, w2, b2, None, None, None, None,
                       activation="relu", use_bn=False)
    for got, ref in zip(feats2, refs2):
        assert jnp.allclose(got, ref, atol=1e-4, rtol=1e-4)

    print("KERNEL_OK")
</pallas_src>

<mosaic_0001>
module attributes {stable_mosaic.version = 11 : i64} {
  func.func @_visnet_kernel_single(%arg0: i32, %arg1: i32, %arg2: memref<8x128xbf16, #tpu.memory_space<vmem>>, %arg3: memref<128x128xbf16, #tpu.memory_space<vmem>>, %arg4: memref<1x128xf32, #tpu.memory_space<vmem>>, %arg5: memref<1x128xf32, #tpu.memory_space<vmem>>, %arg6: memref<8x128xf32, #tpu.memory_space<vmem>>) attributes {dimension_semantics = [#tpu.dimension_semantics<parallel>, #tpu.dimension_semantics<parallel>], iteration_bounds = array<i64: 1, 2>, scalar_prefetch = 0 : i64, scratch_operands = 0 : i64, tpu.core_type = #tpu.core_type<tc>, window_params = [{transform_indices = @transform_0, window_bounds = array<i64: 8, 128>}, {transform_indices = @transform_1, window_bounds = array<i64: 128, 128>}, {transform_indices = @transform_2, window_bounds = array<i64: 1, 128>}, {transform_indices = @transform_3, window_bounds = array<i64: 1, 128>}, {transform_indices = @transform_4, window_bounds = array<i64: 8, 128>}]} {
    %c0 = arith.constant 0 : index
    %c0_0 = arith.constant 0 : index
    %0 = vector.load %arg2[%c0, %c0_0] : memref<8x128xbf16, #tpu.memory_space<vmem>>, vector<8x128xbf16>
    %c0_1 = arith.constant 0 : index
    %c0_2 = arith.constant 0 : index
    %1 = vector.load %arg3[%c0_1, %c0_2] : memref<128x128xbf16, #tpu.memory_space<vmem>>, vector<128x128xbf16>
    %cst = arith.constant dense<0.000000e+00> : vector<8x128xf32>
    %2 = tpu.matmul %0, %1, %cst {dimension_numbers = #tpu.dot_dimension_numbers<[1], [0], [0], [1], [0, 0, 1, 1], [], []>} : vector<8x128xbf16>, vector<128x128xbf16>, vector<8x128xf32> -> vector<8x128xf32>
    %c0_3 = arith.constant 0 : index
    %c0_4 = arith.constant 0 : index
    %3 = vector.load %arg4[%c0_3, %c0_4] : memref<1x128xf32, #tpu.memory_space<vmem>>, vector<1x128xf32>
    %4 = vector.broadcast %3 : vector<1x128xf32> to vector<8x128xf32>
    %5 = arith.mulf %2, %4 : vector<8x128xf32>
    %c0_5 = arith.constant 0 : index
    %c0_6 = arith.constant 0 : index
    %6 = vector.load %arg5[%c0_5, %c0_6] : memref<1x128xf32, #tpu.memory_space<vmem>>, vector<1x128xf32>
    %7 = vector.broadcast %6 : vector<1x128xf32> to vector<8x128xf32>
    %8 = arith.addf %5, %7 : vector<8x128xf32>
    %9 = math.tanh %8 : vector<8x128xf32>
    %c0_7 = arith.constant 0 : index
    %c0_8 = arith.constant 0 : index
    %10 = vector.load %arg6[%c0_7, %c0_8] : memref<8x128xf32, #tpu.memory_space<vmem>>, vector<8x128xf32>
    tpu.vector_store %arg6[%c0_7, %c0_8], %9 {strides = array<i32>} : memref<8x128xf32, #tpu.memory_space<vmem>>, vector<8x128xf32>,
    return
  }
  func.func @transform_0(%arg0: i32, %arg1: i32) -> (i32, i32) {
    %c0_i32 = arith.constant 0 : i32
    %c0_i32_0 = arith.constant 0 : i32
    return %arg0, %c0_i32 : i32, i32
  }
  func.func @transform_1(%arg0: i32, %arg1: i32) -> (i32, i32) {
    %c0_i32 = arith.constant 0 : i32
    %c0_i32_0 = arith.constant 0 : i32
    return %c0_i32, %arg1 : i32, i32
  }
  func.func @transform_2(%arg0: i32, %arg1: i32) -> (i32, i32) {
    %c0_i32 = arith.constant 0 : i32
    %c0_i32_0 = arith.constant 0 : i32
    return %c0_i32, %arg1 : i32, i32
  }
  func.func @transform_3(%arg0: i32, %arg1: i32) -> (i32, i32) {
    %c0_i32 = arith.constant 0 : i32
    %c0_i32_0 = arith.constant 0 : i32
    return %c0_i32, %arg1 : i32, i32
  }
  func.func @transform_4(%arg0: i32, %arg1: i32) -> (i32, i32) {
    %c0_i32 = arith.constant 0 : i32
    return %arg0, %arg1 : i32, i32
  }
}

</mosaic_0001>

<llo_original>
// kernel: tpu_custom_call.1
$region0: #{tpu_custom_call.1}
  #allocation0 [shape = 'u32[]', space=smem, size = 0x4, offset = 0x4, fixed_abs, tag = 'smem constant byte address 0x4 - core index']
  #allocation1 [shape = 'u32[144,128]{1,0:T(1,128)}', space=vmem, size = 0x12000, scoped, tag = 'internal scratch']
  %s0 = inlined_call_operand.hbm [shape: bf16[8,128], index: 0, kind: input, shape index: {}]
  %s1 = inlined_call_operand.hbm [shape: bf16[128,256], index: 1, kind: input, shape index: {}]
  %s2 = inlined_call_operand.vmem [shape: f32[1,256], index: 2, kind: input, shape index: {}]
  %s3 = inlined_call_operand.vmem [shape: f32[1,256], index: 3, kind: input, shape index: {}]
  %s4 = inlined_call_operand.hbm [shape: f32[8,256], index: 4, kind: output, shape index: {}]
  %s5 = sld [smem:[#allocation0]]
  $region57: #{tpu_custom_call.1} parent=0
    _
  %s7 = ssub.s32 1, %s5
  %s8 = scalar_select 0, %s7, %s5
  $region1: #{tpu_custom_call.1} parent=0
    #allocation2 [shape = 'u8[2048]{0}', space=vmem, size = 0x800, scoped, tag = 'input window, operand 0, single buffered']
    #allocation3 [shape = 's32[2]{0}', space=sflag, size = 0x8, scoped, tag = 'scoped memory for tpu_custom_call.1']
    #allocation4 [shape = 's32[2]{0}', space=sflag, size = 0x8, scoped, tag = 'scoped memory for tpu_custom_call.1']
    #allocation5 [shape = 'u8[65536]{0}', space=vmem, size = 0x10000, scoped, tag = 'input window, operand 1']
    #allocation6 [shape = 's32[2]{0}', space=sflag, size = 0x8, scoped, tag = 'scoped memory for tpu_custom_call.1']
    #allocation7 [shape = 'u8[8192]{0}', space=vmem, size = 0x2000, scoped, tag = 'output window, operand 0']
    %9 = vsyncpa [#allocation3], 0
    %10 = vsyncpa [#allocation6], 0
    %s11 = scalar_lea.sflag [#allocation6], 1
    %12 = vsyncpa %s11, 0
    %13 = vsyncpa [#allocation4], 0
    %s14 = scalar_lea.sflag [#allocation4], 1
    %15 = vsyncpa %s14, 0
    loop: start=0, step=1, limit=4
    $region2: #{tpu_custom_call.1} parent=1 // loop_pre_header
      _
    $region3: #{tpu_custom_call.1} parent=1 // loop_header
      %s17 = sphi 0, %s21
      %p18 = scmp.ge.s32.totalorder %s17, 4
      %s24 = sphi 0, %s36
      %s25 = sphi 0, %s32
      %s26 = sphi 0, %s24
      %s27 = sphi 0, %s25
      %s28 = sphi 0, %s26
      %s29 = sphi 0, %s27
      %s39 = sphi 0, %s41
      %s42 = sphi 0, %s39
      %s43 = sphi 0, %s42
      %s59 = sphi 0, %s43
      %s65 = sphi 0, %s67
      %s68 = sphi 0, %s65
      %s69 = sphi 0, %s68
      %s85 = sphi 0, %s69
      %s91 = sphi 0, %s93
      %s94 = sphi 0, %s91
      %s95 = sphi 0, %s94
      %s111 = sphi 0, %s95
      %s117 = sphi 0, %s119
      %s120 = sphi 0, %s117
      %s121 = sphi 0, %s120
      %s137 = sphi 0, %s121
      %s145 = sphi 0, %s147
      %s148 = sphi 0, %s145
      %s149 = sphi 0, %s148
      %s165 = sphi 0, %s149
    $region4: #{tpu_custom_call.1} parent=1 // loop_header_branch
      %20 = sbr.rel (%p18) target = $region8
    $region5: #{tpu_custom_call.1} parent=1 // loop_body
      %s22 = ssub.s32 %s17, 1
      %s23 = ssub.s32 %s17, 2
      %s30 = sadd.s32 1, %s25
      %p31 = scmp.ge.s32.totalorder %s30, 2
      %s32 = scalar_select %p31, 0, %s30
      %s33 = sadd.s32 1, %s24
      %s34 = scalar_select %p31, %s33, %s24
      %p35 = scmp.ge.s32.totalorder %s34, 1
      %s36 = scalar_select %p35, 0, %s34
      %s37 = ssub.s32 %s24, %s36
      %p38 = scmp.eq.s32.totalorder %s37, 0
      %s40 = sadd.s32 %s39, 1
      %s41 = scalar_select %p38, %s39, %s40
      %p44 = pneg %p38
      %p45 = scmp.eq.s32.totalorder %s17, 1
      %p46 = por %p44, %p45
      %p47 = scmp.ne.s32.totalorder %s39, %s42
      %p48 = scmp.eq.s32.totalorder %s17, 0
      %p49 = por %p47, %p48
      %p50 = scmp.ne.s32.totalorder %s39, %s42
      %p51 = scmp.eq.s32.totalorder %s22, 1
      %p52 = por %p50, %p51
      %p53 = scmp.ne.s32.totalorder %s42, %s43
      %p54 = scmp.eq.s32.totalorder %s22, 0
      %p55 = por %p53, %p54
      %p56 = scmp.ne.s32.totalorder %s42, %s43
      %p57 = scmp.eq.s32.totalorder %s23, 1
      %p58 = por %p56, %p57
      %p60 = scmp.ne.s32.totalorder %s43, %s59
      %p61 = scmp.eq.s32.totalorder %s23, 0
      %p62 = por %p60, %p61
      %s63 = ssub.s32 %s25, %s32
      %p64 = scmp.eq.s32.totalorder %s63, 0
      %s66 = sadd.s32 %s65, 1
      %s67 = scalar_select %p64, %s65, %s66
      %p70 = pneg %p64
      %p71 = scmp.eq.s32.totalorder %s17, 1
      %p72 = por %p70, %p71
      %p73 = scmp.ne.s32.totalorder %s65, %s68
      %p74 = scmp.eq.s32.totalorder %s17, 0
      %p75 = por %p73, %p74
      %p76 = scmp.ne.s32.totalorder %s65, %s68
      %p77 = scmp.eq.s32.totalorder %s22, 1
      %p78 = por %p76, %p77
      %p79 = scmp.ne.s32.totalorder %s68, %s69
      %p80 = scmp.eq.s32.totalorder %s22, 0
      %p81 = por %p79, %p80
      %p82 = scmp.ne.s32.totalorder %s68, %s69
      %p83 = scmp.eq.s32.totalorder %s23, 1
      %p84 = por %p82, %p83
      %p86 = scmp.ne.s32.totalorder %s69, %s85
      %p87 = scmp.eq.s32.totalorder %s23, 0
      %p88 = por %p86, %p87
      %s89 = ssub.s32 %s25, %s32
      %p90 = scmp.eq.s32.totalorder %s89, 0
      %s92 = sadd.s32 %s91, 1
      %s93 = scalar_select %p90, %s91, %s92
      %p96 = pneg %p90
      %p97 = scmp.eq.s32.totalorder %s17, 1
      %p98 = por %p96, %p97
      %p99 = scmp.ne.s32.totalorder %s91, %s94
      %p100 = scmp.eq.s32.totalorder %s17, 0
      %p101 = por %p99, %p100
      %p102 = scmp.ne.s32.totalorder %s91, %s94
      %p103 = scmp.eq.s32.totalorder %s22, 1
      %p104 = por %p102, %p103
      %p105 = scmp.ne.s32.totalorder %s94, %s95
      %p106 = scmp.eq.s32.totalorder %s22, 0
      %p107 = por %p105, %p106
      %p108 = scmp.ne.s32.totalorder %s94, %s95
      %p109 = scmp.eq.s32.totalorder %s23, 1
      %p110 = por %p108, %p109
      %p112 = scmp.ne.s32.totalorder %s95, %s111
      %p113 = scmp.eq.s32.totalorder %s23, 0
      %p114 = por %p112, %p113
      %s115 = ssub.s32 %s25, %s32
      %p116 = scmp.eq.s32.totalorder %s115, 0
      %s118 = sadd.s32 %s117, 1
      %s119 = scalar_select %p116, %s117, %s118
      %p122 = pneg %p116
      %p123 = scmp.eq.s32.totalorder %s17, 1
      %p124 = por %p122, %p123
      %p125 = scmp.ne.s32.totalorder %s117, %s120
      %p126 = scmp.eq.s32.totalorder %s17, 0
      %p127 = por %p125, %p126
      %p128 = scmp.ne.s32.totalorder %s117, %s120
      %p129 = scmp.eq.s32.totalorder %s22, 1
      %p130 = por %p128, %p129
      %p131 = scmp.ne.s32.totalorder %s120, %s121
      %p132 = scmp.eq.s32.totalorder %s22, 0
      %p133 = por %p131, %p132
      %p134 = scmp.ne.s32.totalorder %s120, %s121
      %p135 = scmp.eq.s32.totalorder %s23, 1
      %p136 = por %p134, %p135
      %p138 = scmp.ne.s32.totalorder %s121, %s137
      %p139 = scmp.eq.s32.totalorder %s23, 0
      %p140 = por %p138, %p139
      %s141 = ssub.s32 %s24, %s36
      %s142 = ssub.s32 %s25, %s32
      %s143 = sor.u32 %s141, %s142
      %p144 = scmp.eq.s32.totalorder %s143, 0
      %s146 = sadd.s32 %s145, 1
      %s147 = scalar_select %p144, %s145, %s146
      %p150 = pneg %p144
      %p151 = scmp.eq.s32.totalorder %s17, 1
      %p152 = por %p150, %p151
      %p153 = scmp.ne.s32.totalorder %s145, %s148
      %p154 = scmp.eq.s32.totalorder %s17, 0
      %p155 = por %p153, %p154
      %p156 = scmp.ne.s32.totalorder %s145, %s148
      %p157 = scmp.eq.s32.totalorder %s22, 1
      %p158 = por %p156, %p157
      %p159 = scmp.ne.s32.totalorder %s148, %s149
      %p160 = scmp.eq.s32.totalorder %s22, 0
      %p161 = por %p159, %p160
      %p162 = scmp.ne.s32.totalorder %s148, %s149
      %p163 = scmp.eq.s32.totalorder %s23, 1
      %p164 = por %p162, %p163
      %p166 = scmp.ne.s32.totalorder %s149, %s165
      %p167 = scmp.eq.s32.totalorder %s23, 0
      %p168 = por %p166, %p167
      %p169 = scmp.le.s32.totalorder 1, %s17
      %p170 = scmp.lt.s32.totalorder %s17, 3
      %p171 = pnand %p169, %p170
      %p172 = pneg %p171
      // Predicated region
      $region9: #{tpu_custom_call.1} parent=5 // pred_check
        _
      $region10: #{tpu_custom_call.1} parent=5 // pred_check_branch
        %174 = sbr.rel (%p171) target = $region12
      $region11: #{tpu_custom_call.1} parent=5 // pred_region
        %s175 = ssub.s32 %s17, 1
        // Predicated region
        $region13: #{tpu_custom_call.1} parent=11 // pred_check
          %p176 = pneg %p55
        $region14: #{tpu_custom_call.1} parent=11 // pred_check_branch
          %178 = sbr.rel (%p176) target = $region16
        $region15: #{tpu_custom_call.1} parent=11 // pred_region
          %s180 = ssub.s32 64, 64
          %181 = vsyncadd [#allocation3], %s180
          %s182 = smul.addr %s26, 64
          %s183 = scalar_lea.hbm %s0, %s182
          %s185 = sshll.u32 [#allocation2], 4
          %s186 = int_to_ptr.vmem [resolvable:$true] %s185
          %188 = dma.hbm_to_vmem [thread:$0]  %s183, 64, %s186, [#allocation3]
        $region16: #{tpu_custom_call.1} parent=11 // pred_fallthru
          _
      $region12: #{tpu_custom_call.1} parent=5 // pred_fallthru
        _
      %p189 = scmp.lt.s32.totalorder %s17, 2
      // Predicated region
      $region17: #{tpu_custom_call.1} parent=5 // pred_check
        %p190 = pneg %p189
      $region18: #{tpu_custom_call.1} parent=5 // pred_check_branch
        %192 = sbr.rel (%p190) target = $region20
      $region19: #{tpu_custom_call.1} parent=5 // pred_region
        // Predicated region
        $region21: #{tpu_custom_call.1} parent=19 // pred_check
          %p193 = pneg %p75
        $region22: #{tpu_custom_call.1} parent=19 // pred_check_branch
          %195 = sbr.rel (%p193) target = $region24
        $region23: #{tpu_custom_call.1} parent=19 // pred_region
          %s196 = sand.u32 %s65, 1
          %s197 = scalar_lea.sflag [#allocation6], %s196
          %s198 = sand.u32 %s65, 1
          %s199 = smul.addr %s198, 64
          %s200 = scalar_lea.vmem [#allocation5], %s199
          %s202 = ssub.s32 1024, 1024
          %203 = vsyncadd %s197, %s202
          %s204 = smul.addr %s25, 64
          %s205 = scalar_lea.hbm %s1, %s204
          %s206 = sshll.u32 %s200, 4
          %s207 = int_to_ptr.vmem [resolvable:$true] %s206
          %212 = dma.hbm_to_vmem [thread:$0]  %s205, 1024, %s207, %s197, 128, 64, 4
        $region24: #{tpu_custom_call.1} parent=19 // pred_fallthru
          _
        // Predicated region
        $region25: #{tpu_custom_call.1} parent=19 // pred_check
          %p213 = pneg %p101
        $region26: #{tpu_custom_call.1} parent=19 // pred_check_branch
          %215 = sbr.rel (%p213) target = $region28
        $region27: #{tpu_custom_call.1} parent=19 // pred_region
          %p216 = scmp.lt.s32.totalorder %s25, 1
          %s217 = scalar_select %p216, %s25, 1
          %s218 = scalar_lea.vmem %s2, %s217
        $region28: #{tpu_custom_call.1} parent=19 // pred_fallthru
          _
        // Predicated region
        $region29: #{tpu_custom_call.1} parent=19 // pred_check
          %p219 = pneg %p127
        $region30: #{tpu_custom_call.1} parent=19 // pred_check_branch
          %221 = sbr.rel (%p219) target = $region32
        $region31: #{tpu_custom_call.1} parent=19 // pred_region
          %p222 = scmp.lt.s32.totalorder %s25, 1
          %s223 = scalar_select %p222, %s25, 1
          %s224 = scalar_lea.vmem %s3, %s223
        $region32: #{tpu_custom_call.1} parent=19 // pred_fallthru
          _
      $region20: #{tpu_custom_call.1} parent=5 // pred_fallthru
        _
      %p225 = scmp.le.s32.totalorder 1, %s17
      %p226 = scmp.lt.s32.totalorder %s17, 3
      %p227 = pnand %p225, %p226
      %p228 = pneg %p227
      // Predicated region
      $region33: #{tpu_custom_call.1} parent=5 // pred_check
        _
      $region34: #{tpu_custom_call.1} parent=5 // pred_check_branch
        %230 = sbr.rel (%p227) target = $region36
      $region35: #{tpu_custom_call.1} parent=5 // pred_region
        %s231 = ssub.s32 %s17, 1
        // Predicated region
        $region37: #{tpu_custom_call.1} parent=35 // pred_check
          %p232 = pneg %p55
        $region38: #{tpu_custom_call.1} parent=35 // pred_check_branch
          %234 = sbr.rel (%p232) target = $region40
        $region39: #{tpu_custom_call.1} parent=35 // pred_region
          %235 = dma.done [#allocation3], 64
        $region40: #{tpu_custom_call.1} parent=35 // pred_fallthru
          _
        %s236 = sand.u32 %s68, 1
        %s237 = scalar_lea.sflag [#allocation6], %s236
        %s238 = sand.u32 %s68, 1
        %s239 = smul.addr %s238, 64
        %s240 = scalar_lea.vmem [#allocation5], %s239
        // Predicated region
        $region41: #{tpu_custom_call.1} parent=35 // pred_check
          %p241 = pneg %p81
        $region42: #{tpu_custom_call.1} parent=35 // pred_check_branch
          %243 = sbr.rel (%p241) target = $region44
        $region43: #{tpu_custom_call.1} parent=35 // pred_region
          %244 = dma.done %s237, 1024
        $region44: #{tpu_custom_call.1} parent=35 // pred_fallthru
          _
        %p245 = pneg %p55
        %p246 = pneg %p52
        %s247 = sand.u32 %s68, 1
        %s248 = scalar_lea.sflag [#allocation6], %s247
        %s249 = sand.u32 %s68, 1
        %s250 = smul.addr %s249, 64
        %s251 = scalar_lea.vmem [#allocation5], %s250
        %p252 = pneg %p81
        %p253 = pneg %p78
        %p254 = scmp.lt.s32.totalorder %s27, 1
        %s255 = scalar_select %p254, %s27, 1
        %s256 = scalar_lea.vmem %s2, %s255
        %p257 = pneg %p107
        %p258 = pneg %p104
        %p259 = scmp.lt.s32.totalorder %s27, 1
        %s260 = scalar_select %p259, %s27, 1
        %s261 = scalar_lea.vmem %s3, %s260
        %p262 = pneg %p133
        %p263 = pneg %p130
        %p264 = pneg %p161
        %p265 = pneg %p158
        %s266 = sand.u32 %s148, 1
        %s267 = scalar_lea.sflag [#allocation4], %s266
        %s268 = sand.u32 %s148, 1
        %s269 = smul.addr %s268, 8
        %s270 = scalar_lea.vmem [#allocation7], %s269
        %p271 = scmp.lt.s32.totalorder %s27, 1
        %s272 = scalar_select %p271, %s27, 1
        %s273 = scalar_lea.vmem %s2, %s272
        %p274 = scmp.lt.s32.totalorder %s27, 1
        %s275 = scalar_select %p274, %s27, 1
        %s276 = scalar_lea.vmem %s3, %s275
        %v278 = vld [vmem:[#allocation2] sm:$0xf]
        %v279 = vld [vmem:[%s240] sm:$0xf]
        %v280 = vld [vmem:[%s240 + $0x4] sm:$0xf]
        %v281 = vld [vmem:[%s240 + $0x8] sm:$0xf]
        %v282 = vld [vmem:[%s240 + $0xc] sm:$0xf]
        %v283 = vld [vmem:[%s240 + $0x10] sm:$0xf]
        %v284 = vld [vmem:[%s240 + $0x14] sm:$0xf]
        %v285 = vld [vmem:[%s240 + $0x18] sm:$0xf]
        %v286 = vld [vmem:[%s240 + $0x1c] sm:$0xf]
        %v287 = vld [vmem:[%s240 + $0x20] sm:$0xf]
        %v288 = vld [vmem:[%s240 + $0x24] sm:$0xf]
        %v289 = vld [vmem:[%s240 + $0x28] sm:$0xf]
        %v290 = vld [vmem:[%s240 + $0x2c] sm:$0xf]
        %v291 = vld [vmem:[%s240 + $0x30] sm:$0xf]
        %v292 = vld [vmem:[%s240 + $0x34] sm:$0xf]
        %v293 = vld [vmem:[%s240 + $0x38] sm:$0xf]
        %v294 = vld [vmem:[%s240 + $0x3c] sm:$0xf]
        %v311 = vunpack.c.l.b16 %v279
        %v312 = vunpack.c.l.b16 %v280
        %v313 = vunpack.c.l.b16 %v281
        %v314 = vunpack.c.l.b16 %v282
        %v315 = vunpack.c.l.b16 %v283
        %v316 = vunpack.c.l.b16 %v284
        %v317 = vunpack.c.l.b16 %v285
        %v318 = vunpack.c.l.b16 %v286
        %v319 = vunpack.c.l.b16 %v287
        %v320 = vunpack.c.l.b16 %v288
        %v321 = vunpack.c.l.b16 %v289
        %v322 = vunpack.c.l.b16 %v290
        %v323 = vunpack.c.l.b16 %v291
        %v324 = vunpack.c.l.b16 %v292
        %v325 = vunpack.c.l.b16 %v293
        %v326 = vunpack.c.l.b16 %v294
        %v327 = vpack.c.b16 %v312, %v311
        %v328 = vpack.c.b16 %v314, %v313
        %v329 = vpack.c.b16 %v316, %v315
        %v330 = vpack.c.b16 %v318, %v317
        %v331 = vpack.c.b16 %v320, %v319
        %v332 = vpack.c.b16 %v322, %v321
        %v333 = vpack.c.b16 %v324, %v323
        %v334 = vpack.c.b16 %v326, %v325
        %343 = vmatprep.subr.bf16.mxu0 0
        %344 = vmatpush1.bf16.msra.mxu0 %v334
        %345 = vmatprep.subr.bf16.mxu0 0
        %346 = vmatpush1.bf16.msra.mxu0 %v333
        %347 = vmatprep.subr.bf16.mxu0 0
        %348 = vmatpush1.bf16.msra.mxu0 %v332
        %349 = vmatprep.subr.bf16.mxu0 0
        %350 = vmatpush1.bf16.msra.mxu0 %v331
        %351 = vmatprep.subr.bf16.mxu0 0
        %352 = vmatpush1.bf16.msra.mxu0 %v330
        %353 = vmatprep.subr.bf16.mxu0 0
        %354 = vmatpush1.bf16.msra.mxu0 %v329
        %355 = vmatprep.subr.bf16.mxu0 0
        %356 = vmatpush1.bf16.msra.mxu0 %v328
        %357 = vmatprep.subr.bf16.mxu0 0
        %358 = vmatpush1.bf16.msra.mxu0 %v327
        %359 = vmatprep.subr.bf16.mxu0 0
        %360 = vmatpush2.bf16.msra.mxu0 0
        %361 = vmatprep.subr.bf16.mxu0 0
        %362 = vmatpush2.bf16.msra.mxu0 0
        %363 = vmatprep.subr.bf16.mxu0 0
        %364 = vmatpush2.bf16.msra.mxu0 0
        %365 = vmatprep.subr.bf16.mxu0 0
        %366 = vmatpush2.bf16.msra.mxu0 0
        %367 = vmatprep.subr.bf16.mxu0 0
        %368 = vmatpush2.bf16.msra.mxu0 0
        %369 = vmatprep.subr.bf16.mxu0 0
        %370 = vmatpush2.bf16.msra.mxu0 0
        %371 = vmatprep.subr.bf16.mxu0 0
        %372 = vmatpush2.bf16.msra.mxu0 0
        %373 = vmatprep.subr.bf16.mxu0 0
        %374 = vmatpush2.bf16.msra.mxu0 0
        %375 = vmatprep.mubr.bf16.mxu0 0
        %376 = vmatmul.mubr.bf16.gmra.mxu0 %v278
        %v377 = vpop.f32.mrf.mxu0
        %v378 = vadd.f32 0.0, %v377
        %v379 = vpop.f32.mrf.mxu0
        %v380 = vpop.f32.mrf.mxu0
        %v381 = vpop.f32.mrf.mxu0
        %382 = vdwg.mxu0
        %v383 = vld [vmem:[%s273] sm:$0x1]
        %v385 = vlaneseq
        %v386 = vshrl.u32 %v385, 7
        %v387 = vsub.s32 0, %v386
        %v388 = vrot.slane %v383, %v387
        %v390 = vmul.f32 %v378, %v388
        %v391 = vld [vmem:[%s276] sm:$0x1]
        %v393 = vlaneseq
        %v394 = vshrl.u32 %v393, 7
        %v395 = vsub.s32 0, %v394
        %v396 = vrot.slane %v391, %v395
        %v398 = vadd.f32 %v390, %v396
        %v399 = vtanh.pop %v398
        %400 = vst [vmem:[%s270] sm:$0xff] %v399
        %s401 = sand.u32 %s148, 1
        %s402 = scalar_lea.sflag [#allocation4], %s401
        %s403 = sand.u32 %s148, 1
        %s404 = smul.addr %s403, 8
        %s405 = scalar_lea.vmem [#allocation7], %s404
        // Predicated region
        $region45: #{tpu_custom_call.1} parent=35 // pred_check
          %p406 = pneg %p158
        $region46: #{tpu_custom_call.1} parent=35 // pred_check_branch
          %408 = sbr.rel (%p406) target = $region48
        $region47: #{tpu_custom_call.1} parent=35 // pred_region
          %s410 = ssub.s32 128, 128
          %411 = vsyncadd %s402, %s410
          %s412 = smul.addr %s26, 2
          %s413 = sadd.s32 %s27, %s412
          %s414 = smul.addr %s413, 128
          %s415 = scalar_lea.hbm %s4, %s414
          %s417 = sshll.u32 %s405, 4
          %s418 = int_to_ptr.vmem [resolvable:$true] %s417
          %420 = dma.vmem_to_hbm [thread:$0]  %s418, 128, %s415, %s402
        $region48: #{tpu_custom_call.1} parent=35 // pred_fallthru
          _
      $region36: #{tpu_custom_call.1} parent=5 // pred_fallthru
        _
      %p421 = scmp.le.s32.totalorder 2, %s17
      // Predicated region
      $region49: #{tpu_custom_call.1} parent=5 // pred_check
        %p422 = pneg %p421
      $region50: #{tpu_custom_call.1} parent=5 // pred_check_branch
        %424 = sbr.rel (%p422) target = $region52
      $region51: #{tpu_custom_call.1} parent=5 // pred_region
        %s425 = ssub.s32 %s17, 2
        // Predicated region
        $region53: #{tpu_custom_call.1} parent=51 // pred_check
          %p426 = pneg %p164
        $region54: #{tpu_custom_call.1} parent=51 // pred_check_branch
          %428 = sbr.rel (%p426) target = $region56
        $region55: #{tpu_custom_call.1} parent=51 // pred_region
          %s429 = sand.u32 %s149, 1
          %s430 = scalar_lea.sflag [#allocation4], %s429
          %s431 = sand.u32 %s149, 1
          %s432 = smul.addr %s431, 8
          %s433 = scalar_lea.vmem [#allocation7], %s432
          %434 = dma.done %s430, 128
        $region56: #{tpu_custom_call.1} parent=51 // pred_fallthru
          _
      $region52: #{tpu_custom_call.1} parent=5 // pred_fallthru
        _
    $region6: #{tpu_custom_call.1} parent=1 // loop_footer
      %s21 = sadd.s32 1, %s17
    $region7: #{tpu_custom_call.1} parent=1 // loop_footer_branch
      %16 = sbr.rel target = $region3
    $region8: #{tpu_custom_call.1} parent=1 // loop_exit
      _
    %435 = vsyncpa [#allocation3], 1
    %s436 = scalar_lea.sflag [#allocation3], 1
    %437 = vsyncpa %s436, 1
    %438 = vsyncpa [#allocation6], 1
    %s439 = scalar_lea.sflag [#allocation6], 1
    %440 = vsyncpa %s439, 1
    %441 = vsyncpa [#allocation4], 1
    %s442 = scalar_lea.sflag [#allocation4], 1
    %443 = vsyncpa %s442, 1

</llo_original>
